<compile_context>
chip_gen: v7x
topology: tpu7x:2x2x1
jax: 0.10.0
libtpu: 0.0.40
codegen_flags: <defaults>
</compile_context>

<pallas_src>
import jax
import jax.numpy as jnp
from jax.experimental import pallas as pl
from jax.experimental.pallas import tpu as pltpu

_LANE = 128


def _round_up(n, m):
    return ((n + m - 1) // m) * m


def _make_dae_kernel(num_layers, relu_flags, compute_dtype):
    """Build a kernel for one (TILE_B, Dp) batch tile through all layers."""

    def kernel(x_ref, *refs):
        o_ref = refs[-1]
        p_refs = refs[:-1]
        # Cast the f32 input tile to bf16 inside the kernel (no host pre-pass).
        h = x_ref[...].astype(compute_dtype)
        for i in range(num_layers):
            w_ref, b_ref = p_refs[2 * i], p_refs[2 * i + 1]
            # MXU matmul (bf16 x bf16 -> f32 accumulate); bias add in f32 (VPU).
            h = (jnp.dot(h, w_ref[...], preferred_element_type=jnp.float32)
                 + b_ref[...])
            if relu_flags[i]:
                h = jnp.maximum(h, 0.0)
            if i != num_layers - 1:
                h = h.astype(compute_dtype)
        o_ref[...] = h.astype(o_ref.dtype)

    return kernel


def _pad_params_lane_dense(params, lane=_LANE):
    """Zero-pad every feature dim (input, hiddens, latent, output) to a
    multiple of `lane` (128).  Zero rows/cols and zero bias entries keep padded
    lanes exactly zero through every Linear/ReLU, so real-lane results are
    unchanged while all loads/stores stay lane-dense and unmasked."""
    dims = [params[0][0].shape[0]] + [w.shape[1] for w, _ in params]
    pdims = [_round_up(d, lane) for d in dims]
    out = []
    for i, (w, b) in enumerate(params):
        din, dout = w.shape
        pin, pout = pdims[i], pdims[i + 1]
        wp = jnp.zeros((pin, pout), w.dtype).at[:din, :dout].set(w)
        bp = jnp.zeros((pout,), b.dtype).at[:dout].set(b)
        out.append((wp, bp))
    return out, pdims


def denoising_autoencoder_forward(x, params, *, tile_b=512,
                                  compute_dtype=jnp.bfloat16,
                                  out_dtype=None,
                                  fuse_latent=False,
                                  vmem_budget_bytes=48 * 1024 * 1024):
    """x: (B, input_dim) float32. params: list of (W, b) with W = (in, out)."""
    B, D = x.shape
    out_dtype = x.dtype if out_dtype is None else jnp.dtype(out_dtype)
    out_dim = params[-1][0].shape[1]

    # ReLU after every layer except the latent projection and the final layer
    # (matches nn.Sequential construction in the PyTorch module).
    n = len(params)
    relu_flags = [i != n // 2 - 1 and i != n - 1 for i in range(n)]
    work = [(jnp.asarray(w, jnp.float32), jnp.asarray(b, jnp.float32))
            for (w, b) in params]

    if fuse_latent and n >= 2 and not relu_flags[n // 2 - 1]:
        # Linear(64,32) -> Linear(32,64) with no ReLU between: fuse into one
        # layer (W = W3 @ W4, b = b3 @ W4 + b4).  Skips the latent bf16 round.
        i = n // 2 - 1
        (w3, b3), (w4, b4) = work[i], work[i + 1]
        work = work[:i] + [(w3 @ w4, b3 @ w4 + b4)] + work[i + 2:]
        relu_flags = relu_flags[:i] + [relu_flags[i + 1]] + relu_flags[i + 2:]
    num_layers = len(work)

    # Lane-dense padding of ALL feature dims + bf16 weights / f32 row-biases.
    padded, pdims = _pad_params_lane_dense(work)
    dp_in, dp_out = pdims[0], pdims[-1]
    max_width = max(pdims)
    flat = []
    for w, b in padded:
        flat.append(jnp.asarray(w, compute_dtype))
        flat.append(jnp.asarray(b, jnp.float32).reshape(1, -1))
    w_bytes = sum(a.size * a.dtype.itemsize for a in flat)

    # ---- batch tile selection against an explicit VMEM budget (v7x-safe) ----
    x_itemsize = jnp.dtype(x.dtype).itemsize
    out_itemsize = jnp.dtype(out_dtype).itemsize

    def vmem_estimate(tb):
        in_b = 2 * tb * dp_in * x_itemsize          # double-buffered input tile
        out_b = 2 * tb * dp_out * out_itemsize      # double-buffered output tile
        inter = 4 * tb * max_width * 4              # a few live f32 intermediates
        return in_b + out_b + 2 * w_bytes + inter   # weights default-double-buffered

    tile_b_eff = min(_round_up(tile_b, 8), _round_up(B, 8))
    while tile_b_eff > 64 and vmem_estimate(tile_b_eff) > vmem_budget_bytes:
        tile_b_eff = _round_up(tile_b_eff // 2, 8)

    num_tiles = pl.cdiv(B, tile_b_eff)
    bp = num_tiles * tile_b_eff

    # Pad only when the shapes require it (x stays in its original f32 layout).
    xp = x
    if bp != B or dp_in != D:
        xp = jnp.pad(x, ((0, bp - B), (0, dp_in - D)))

    # BlockSpecs: activations tiled over batch; weights/biases resident in VMEM
    # (constant index_map -> DMA'd once, reused every grid step).
    x_spec = pl.BlockSpec((tile_b_eff, dp_in), lambda i: (i, 0))
    out_spec = pl.BlockSpec((tile_b_eff, dp_out), lambda i: (i, 0))
    param_specs = [pl.BlockSpec(a.shape, lambda i: (0, 0)) for a in flat]
    # NOTE: pipeline_mode=pl.Buffered(1) on the resident params would halve
    # their footprint; irrelevant at this D so left at the default.

    # Advisory cost estimate (unpadded dims, streamed bytes only).
    flops = 2 * B * sum(w.shape[0] * w.shape[1] for w, _ in work)
    bytes_accessed = (w_bytes + B * D * x_itemsize + B * out_dim * out_itemsize)
    cost = pl.CostEstimate(flops=flops, transcendentals=0,
                           bytes_accessed=bytes_accessed)

    vmem_limit = int(min(64 * 1024 * 1024,
                         max(32 * 1024 * 1024,
                             vmem_estimate(tile_b_eff) + (4 << 20))))

    kernel = _make_dae_kernel(num_layers, tuple(relu_flags), compute_dtype)

    out = pl.pallas_call(
        kernel,
        out_shape=jax.ShapeDtypeStruct((bp, dp_out), out_dtype),
        grid=(num_tiles,),
        in_specs=[x_spec] + param_specs,
        out_specs=out_spec,
        compiler_params=pltpu.CompilerParams(
            dimension_semantics=("parallel",),   # 2 TCs on v7x; no-op elsewhere
            vmem_limit_bytes=vmem_limit,
        ),
        cost_estimate=cost,
    )(xp, *flat)

    return out[:B, :out_dim]


def make_params(key, input_dim, hidden_dims=(128, 64), latent_dim=32):
    """Deterministic synthetic parameters matching the PyTorch module's shapes.
    Returns list of (W, b) in forward order with W shaped (in, out)."""
    enc_dims = [input_dim] + list(hidden_dims) + [latent_dim]
    dec_dims = [latent_dim] + list(hidden_dims[::-1]) + [input_dim]
    dims_pairs = (list(zip(enc_dims[:-1], enc_dims[1:])) +
                  list(zip(dec_dims[:-1], dec_dims[1:])))
    params = []
    for (din, dout) in dims_pairs:
        key, kw, kb = jax.random.split(key, 3)
        scale = 1.0 / jnp.sqrt(jnp.float32(din))  # ~ PyTorch Linear init scale
        w = jax.random.uniform(kw, (din, dout), jnp.float32, -scale, scale)
        b = jax.random.uniform(kb, (dout,), jnp.float32, -scale, scale)
        params.append((w, b))
    return params


def reference_forward(x, params, compute_dtype=jnp.bfloat16, out_dtype=None):
    """Pure-JAX reference matching the kernel's bf16-in / f32-accumulate math."""
    out_dtype = x.dtype if out_dtype is None else out_dtype
    n = len(params)
    h = x.astype(compute_dtype)
    for i, (w, b) in enumerate(params):
        h = (jnp.dot(h, jnp.asarray(w, compute_dtype),
                     preferred_element_type=jnp.float32)
             + jnp.asarray(b, jnp.float32))
        if i != n // 2 - 1 and i != n - 1:   # ReLU except latent & final
            h = jnp.maximum(h, 0.0)
        if i != n - 1:
            h = h.astype(compute_dtype)
    return h.astype(out_dtype)


if __name__ == "__main__":
    key = jax.random.PRNGKey(0)
    kx, kp = jax.random.split(key)

    # Small, module-consistent shapes (e.g. flattened 16 keypoints x 3 coords).
    batch = 32
    input_dim = 48
    x = jax.random.normal(kx, (batch, input_dim), jnp.float32)

    params = make_params(kp, input_dim, hidden_dims=(128, 64), latent_dim=32)

    out = denoising_autoencoder_forward(x, params)   # default: f32 out, unfused
    out = jax.block_until_ready(out)

    ref = reference_forward(x, params)
    assert out.shape == (batch, input_dim), out.shape
    assert jnp.allclose(out, ref, atol=2e-2, rtol=2e-2), \
        f"mismatch vs JAX reference, max abs err {jnp.max(jnp.abs(out - ref))}"

    print("KERNEL_OK")
</pallas_src>

<mosaic_0001>
module attributes {stable_mosaic.version = 11 : i64} {
  func.func @kernel(%arg0: i32, %arg1: memref<32x128xf32, #tpu.memory_space<vmem>>, %arg2: memref<128x128xbf16, #tpu.memory_space<vmem>>, %arg3: memref<1x128xf32, #tpu.memory_space<vmem>>, %arg4: memref<128x128xbf16, #tpu.memory_space<vmem>>, %arg5: memref<1x128xf32, #tpu.memory_space<vmem>>, %arg6: memref<128x128xbf16, #tpu.memory_space<vmem>>, %arg7: memref<1x128xf32, #tpu.memory_space<vmem>>, %arg8: memref<128x128xbf16, #tpu.memory_space<vmem>>, %arg9: memref<1x128xf32, #tpu.memory_space<vmem>>, %arg10: memref<128x128xbf16, #tpu.memory_space<vmem>>, %arg11: memref<1x128xf32, #tpu.memory_space<vmem>>, %arg12: memref<128x128xbf16, #tpu.memory_space<vmem>>, %arg13: memref<1x128xf32, #tpu.memory_space<vmem>>, %arg14: memref<32x128xf32, #tpu.memory_space<vmem>>) attributes {dimension_semantics = [#tpu.dimension_semantics<parallel>], iteration_bounds = array<i64: 1>, scalar_prefetch = 0 : i64, scratch_operands = 0 : i64, tpu.core_type = #tpu.core_type<tc>, window_params = [{transform_indices = @transform_0, window_bounds = array<i64: 32, 128>}, {pipeline_mode = #tpu.pipeline_mode<synchronous>, transform_indices = @transform_1, window_bounds = array<i64: 128, 128>}, {pipeline_mode = #tpu.pipeline_mode<synchronous>, transform_indices = @transform_2, window_bounds = array<i64: 1, 128>}, {pipeline_mode = #tpu.pipeline_mode<synchronous>, transform_indices = @transform_3, window_bounds = array<i64: 128, 128>}, {pipeline_mode = #tpu.pipeline_mode<synchronous>, transform_indices = @transform_4, window_bounds = array<i64: 1, 128>}, {pipeline_mode = #tpu.pipeline_mode<synchronous>, transform_indices = @transform_5, window_bounds = array<i64: 128, 128>}, {pipeline_mode = #tpu.pipeline_mode<synchronous>, transform_indices = @transform_6, window_bounds = array<i64: 1, 128>}, {pipeline_mode = #tpu.pipeline_mode<synchronous>, transform_indices = @transform_7, window_bounds = array<i64: 128, 128>}, {pipeline_mode = #tpu.pipeline_mode<synchronous>, transform_indices = @transform_8, window_bounds = array<i64: 1, 128>}, {pipeline_mode = #tpu.pipeline_mode<synchronous>, transform_indices = @transform_9, window_bounds = array<i64: 128, 128>}, {pipeline_mode = #tpu.pipeline_mode<synchronous>, transform_indices = @transform_10, window_bounds = array<i64: 1, 128>}, {pipeline_mode = #tpu.pipeline_mode<synchronous>, transform_indices = @transform_11, window_bounds = array<i64: 128, 128>}, {pipeline_mode = #tpu.pipeline_mode<synchronous>, transform_indices = @transform_12, window_bounds = array<i64: 1, 128>}, {transform_indices = @transform_13, window_bounds = array<i64: 32, 128>}]} {
    %c0 = arith.constant 0 : index
    %c0_0 = arith.constant 0 : index
    %0 = vector.load %arg1[%c0, %c0_0] : memref<32x128xf32, #tpu.memory_space<vmem>>, vector<32x128xf32>
    %1 = arith.truncf %0 : vector<32x128xf32> to vector<32x128xbf16>
    %c0_1 = arith.constant 0 : index
    %c0_2 = arith.constant 0 : index
    %2 = vector.load %arg2[%c0_1, %c0_2] : memref<128x128xbf16, #tpu.memory_space<vmem>>, vector<128x128xbf16>
    %cst = arith.constant dense<0.000000e+00> : vector<32x128xf32>
    %3 = tpu.matmul %1, %2, %cst {dimension_numbers = #tpu.dot_dimension_numbers<[1], [0], [0], [1], [0, 0, 1, 1], [], []>} : vector<32x128xbf16>, vector<128x128xbf16>, vector<32x128xf32> -> vector<32x128xf32>
    %c0_3 = arith.constant 0 : index
    %c0_4 = arith.constant 0 : index
    %4 = vector.load %arg3[%c0_3, %c0_4] : memref<1x128xf32, #tpu.memory_space<vmem>>, vector<1x128xf32>
    %5 = vector.broadcast %4 : vector<1x128xf32> to vector<32x128xf32>
    %6 = arith.addf %3, %5 : vector<32x128xf32>
    %cst_5 = arith.constant 0.000000e+00 : f32
    %7 = vector.broadcast %cst_5 : f32 to vector<32x128xf32>
    %8 = arith.maximumf %6, %7 : vector<32x128xf32>
    %9 = arith.truncf %8 : vector<32x128xf32> to vector<32x128xbf16>
    %c0_6 = arith.constant 0 : index
    %c0_7 = arith.constant 0 : index
    %10 = vector.load %arg4[%c0_6, %c0_7] : memref<128x128xbf16, #tpu.memory_space<vmem>>, vector<128x128xbf16>
    %cst_8 = arith.constant dense<0.000000e+00> : vector<32x128xf32>
    %11 = tpu.matmul %9, %10, %cst_8 {dimension_numbers = #tpu.dot_dimension_numbers<[1], [0], [0], [1], [0, 0, 1, 1], [], []>} : vector<32x128xbf16>, vector<128x128xbf16>, vector<32x128xf32> -> vector<32x128xf32>
    %c0_9 = arith.constant 0 : index
    %c0_10 = arith.constant 0 : index
    %12 = vector.load %arg5[%c0_9, %c0_10] : memref<1x128xf32, #tpu.memory_space<vmem>>, vector<1x128xf32>
    %13 = vector.broadcast %12 : vector<1x128xf32> to vector<32x128xf32>
    %14 = arith.addf %11, %13 : vector<32x128xf32>
    %cst_11 = arith.constant 0.000000e+00 : f32
    %15 = vector.broadcast %cst_11 : f32 to vector<32x128xf32>
    %16 = arith.maximumf %14, %15 : vector<32x128xf32>
    %17 = arith.truncf %16 : vector<32x128xf32> to vector<32x128xbf16>
    %c0_12 = arith.constant 0 : index
    %c0_13 = arith.constant 0 : index
    %18 = vector.load %arg6[%c0_12, %c0_13] : memref<128x128xbf16, #tpu.memory_space<vmem>>, vector<128x128xbf16>
    %cst_14 = arith.constant dense<0.000000e+00> : vector<32x128xf32>
    %19 = tpu.matmul %17, %18, %cst_14 {dimension_numbers = #tpu.dot_dimension_numbers<[1], [0], [0], [1], [0, 0, 1, 1], [], []>} : vector<32x128xbf16>, vector<128x128xbf16>, vector<32x128xf32> -> vector<32x128xf32>
    %c0_15 = arith.constant 0 : index
    %c0_16 = arith.constant 0 : index
    %20 = vector.load %arg7[%c0_15, %c0_16] : memref<1x128xf32, #tpu.memory_space<vmem>>, vector<1x128xf32>
    %21 = vector.broadcast %20 : vector<1x128xf32> to vector<32x128xf32>
    %22 = arith.addf %19, %21 : vector<32x128xf32>
    %23 = arith.truncf %22 : vector<32x128xf32> to vector<32x128xbf16>
    %c0_17 = arith.constant 0 : index
    %c0_18 = arith.constant 0 : index
    %24 = vector.load %arg8[%c0_17, %c0_18] : memref<128x128xbf16, #tpu.memory_space<vmem>>, vector<128x128xbf16>
    %cst_19 = arith.constant dense<0.000000e+00> : vector<32x128xf32>
    %25 = tpu.matmul %23, %24, %cst_19 {dimension_numbers = #tpu.dot_dimension_numbers<[1], [0], [0], [1], [0, 0, 1, 1], [], []>} : vector<32x128xbf16>, vector<128x128xbf16>, vector<32x128xf32> -> vector<32x128xf32>
    %c0_20 = arith.constant 0 : index
    %c0_21 = arith.constant 0 : index
    %26 = vector.load %arg9[%c0_20, %c0_21] : memref<1x128xf32, #tpu.memory_space<vmem>>, vector<1x128xf32>
    %27 = vector.broadcast %26 : vector<1x128xf32> to vector<32x128xf32>
    %28 = arith.addf %25, %27 : vector<32x128xf32>
    %cst_22 = arith.constant 0.000000e+00 : f32
    %29 = vector.broadcast %cst_22 : f32 to vector<32x128xf32>
    %30 = arith.maximumf %28, %29 : vector<32x128xf32>
    %31 = arith.truncf %30 : vector<32x128xf32> to vector<32x128xbf16>
    %c0_23 = arith.constant 0 : index
    %c0_24 = arith.constant 0 : index
    %32 = vector.load %arg10[%c0_23, %c0_24] : memref<128x128xbf16, #tpu.memory_space<vmem>>, vector<128x128xbf16>
    %cst_25 = arith.constant dense<0.000000e+00> : vector<32x128xf32>
    %33 = tpu.matmul %31, %32, %cst_25 {dimension_numbers = #tpu.dot_dimension_numbers<[1], [0], [0], [1], [0, 0, 1, 1], [], []>} : vector<32x128xbf16>, vector<128x128xbf16>, vector<32x128xf32> -> vector<32x128xf32>
    %c0_26 = arith.constant 0 : index
    %c0_27 = arith.constant 0 : index
    %34 = vector.load %arg11[%c0_26, %c0_27] : memref<1x128xf32, #tpu.memory_space<vmem>>, vector<1x128xf32>
    %35 = vector.broadcast %34 : vector<1x128xf32> to vector<32x128xf32>
    %36 = arith.addf %33, %35 : vector<32x128xf32>
    %cst_28 = arith.constant 0.000000e+00 : f32
    %37 = vector.broadcast %cst_28 : f32 to vector<32x128xf32>
    %38 = arith.maximumf %36, %37 : vector<32x128xf32>
    %39 = arith.truncf %38 : vector<32x128xf32> to vector<32x128xbf16>
    %c0_29 = arith.constant 0 : index
    %c0_30 = arith.constant 0 : index
    %40 = vector.load %arg12[%c0_29, %c0_30] : memref<128x128xbf16, #tpu.memory_space<vmem>>, vector<128x128xbf16>
    %cst_31 = arith.constant dense<0.000000e+00> : vector<32x128xf32>
    %41 = tpu.matmul %39, %40, %cst_31 {dimension_numbers = #tpu.dot_dimension_numbers<[1], [0], [0], [1], [0, 0, 1, 1], [], []>} : vector<32x128xbf16>, vector<128x128xbf16>, vector<32x128xf32> -> vector<32x128xf32>
    %c0_32 = arith.constant 0 : index
    %c0_33 = arith.constant 0 : index
    %42 = vector.load %arg13[%c0_32, %c0_33] : memref<1x128xf32, #tpu.memory_space<vmem>>, vector<1x128xf32>
    %43 = vector.broadcast %42 : vector<1x128xf32> to vector<32x128xf32>
    %44 = arith.addf %41, %43 : vector<32x128xf32>
    %c0_34 = arith.constant 0 : index
    %c0_35 = arith.constant 0 : index
    %45 = vector.load %arg14[%c0_34, %c0_35] : memref<32x128xf32, #tpu.memory_space<vmem>>, vector<32x128xf32>
    tpu.vector_store %arg14[%c0_34, %c0_35], %44 {strides = array<i32>} : memref<32x128xf32, #tpu.memory_space<vmem>>, vector<32x128xf32>,
    return
  }
  func.func @transform_0(%arg0: i32) -> (i32, i32) {
    %c0_i32 = arith.constant 0 : i32
    %c0_i32_0 = arith.constant 0 : i32
    return %arg0, %c0_i32 : i32, i32
  }
  func.func @transform_1(%arg0: i32) -> (i32, i32) {
    %c0_i32 = arith.constant 0 : i32
    %c0_i32_0 = arith.constant 0 : i32
    %c0_i32_1 = arith.constant 0 : i32
    return %c0_i32, %c0_i32_0 : i32, i32
  }
  func.func @transform_2(%arg0: i32) -> (i32, i32) {
    %c0_i32 = arith.constant 0 : i32
    %c0_i32_0 = arith.constant 0 : i32
    %c0_i32_1 = arith.constant 0 : i32
    return %c0_i32, %c0_i32_0 : i32, i32
  }
  func.func @transform_3(%arg0: i32) -> (i32, i32) {
    %c0_i32 = arith.constant 0 : i32
    %c0_i32_0 = arith.constant 0 : i32
    %c0_i32_1 = arith.constant 0 : i32
    return %c0_i32, %c0_i32_0 : i32, i32
  }
  func.func @transform_4(%arg0: i32) -> (i32, i32) {
    %c0_i32 = arith.constant 0 : i32
    %c0_i32_0 = arith.constant 0 : i32
    %c0_i32_1 = arith.constant 0 : i32
    return %c0_i32, %c0_i32_0 : i32, i32
  }
  func.func @transform_5(%arg0: i32) -> (i32, i32) {
    %c0_i32 = arith.constant 0 : i32
    %c0_i32_0 = arith.constant 0 : i32
    %c0_i32_1 = arith.constant 0 : i32
    return %c0_i32, %c0_i32_0 : i32, i32
  }
  func.func @transform_6(%arg0: i32) -> (i32, i32) {
    %c0_i32 = arith.constant 0 : i32
    %c0_i32_0 = arith.constant 0 : i32
    %c0_i32_1 = arith.constant 0 : i32
    return %c0_i32, %c0_i32_0 : i32, i32
  }
  func.func @transform_7(%arg0: i32) -> (i32, i32) {
    %c0_i32 = arith.constant 0 : i32
    %c0_i32_0 = arith.constant 0 : i32
    %c0_i32_1 = arith.constant 0 : i32
    return %c0_i32, %c0_i32_0 : i32, i32
  }
  func.func @transform_8(%arg0: i32) -> (i32, i32) {
    %c0_i32 = arith.constant 0 : i32
    %c0_i32_0 = arith.constant 0 : i32
    %c0_i32_1 = arith.constant 0 : i32
    return %c0_i32, %c0_i32_0 : i32, i32
  }
  func.func @transform_9(%arg0: i32) -> (i32, i32) {
    %c0_i32 = arith.constant 0 : i32
    %c0_i32_0 = arith.constant 0 : i32
    %c0_i32_1 = arith.constant 0 : i32
    return %c0_i32, %c0_i32_0 : i32, i32
  }
  func.func @transform_10(%arg0: i32) -> (i32, i32) {
    %c0_i32 = arith.constant 0 : i32
    %c0_i32_0 = arith.constant 0 : i32
    %c0_i32_1 = arith.constant 0 : i32
    return %c0_i32, %c0_i32_0 : i32, i32
  }
  func.func @transform_11(%arg0: i32) -> (i32, i32) {
    %c0_i32 = arith.constant 0 : i32
    %c0_i32_0 = arith.constant 0 : i32
    %c0_i32_1 = arith.constant 0 : i32
    return %c0_i32, %c0_i32_0 : i32, i32
  }
  func.func @transform_12(%arg0: i32) -> (i32, i32) {
    %c0_i32 = arith.constant 0 : i32
    %c0_i32_0 = arith.constant 0 : i32
    %c0_i32_1 = arith.constant 0 : i32
    return %c0_i32, %c0_i32_0 : i32, i32
  }
  func.func @transform_13(%arg0: i32) -> (i32, i32) {
    %c0_i32 = arith.constant 0 : i32
    %c0_i32_0 = arith.constant 0 : i32
    return %arg0, %c0_i32 : i32, i32
  }
}

</mosaic_0001>

<llo_original>
// kernel: tpu_custom_call.1
$region0: #{tpu_custom_call.1}
  #allocation0 [shape = 'u32[]', space=smem, size = 0x4, offset = 0x4, fixed_abs, tag = 'smem constant byte address 0x4 - core index']
  #allocation1 [shape = 'u32[144,128]{1,0:T(1,128)}', space=vmem, size = 0x12000, scoped, tag = 'internal scratch']
  %s0 = inlined_call_operand.hbm [shape: f32[32,128], index: 0, kind: input, shape index: {}]
  %s1 = inlined_call_operand.hbm [shape: bf16[128,128], index: 1, kind: input, shape index: {}]
  %s2 = inlined_call_operand.vmem [shape: f32[1,128], index: 2, kind: input, shape index: {}]
  %s3 = inlined_call_operand.hbm [shape: bf16[128,128], index: 3, kind: input, shape index: {}]
  %s4 = inlined_call_operand.vmem [shape: f32[1,128], index: 4, kind: input, shape index: {}]
  %s5 = inlined_call_operand.hbm [shape: bf16[128,128], index: 5, kind: input, shape index: {}]
  %s6 = inlined_call_operand.vmem [shape: f32[1,128], index: 6, kind: input, shape index: {}]
  %s7 = inlined_call_operand.hbm [shape: bf16[128,128], index: 7, kind: input, shape index: {}]
  %s8 = inlined_call_operand.vmem [shape: f32[1,128], index: 8, kind: input, shape index: {}]
  %s9 = inlined_call_operand.hbm [shape: bf16[128,128], index: 9, kind: input, shape index: {}]
  %s10 = inlined_call_operand.vmem [shape: f32[1,128], index: 10, kind: input, shape index: {}]
  %s11 = inlined_call_operand.hbm [shape: bf16[128,128], index: 11, kind: input, shape index: {}]
  %s12 = inlined_call_operand.vmem [shape: f32[1,128], index: 12, kind: input, shape index: {}]
  %s13 = inlined_call_operand.hbm [shape: f32[32,128], index: 13, kind: output, shape index: {}]
  %s14 = sld [smem:[#allocation0]]
  $region90: #{tpu_custom_call.1} parent=0
    _
  %s16 = ssub.s32 1, %s14
  %s17 = scalar_select 0, %s16, %s14
  $region1: #{tpu_custom_call.1} parent=0
    #allocation2 [shape = 'u8[16384]{0}', space=vmem, size = 0x4000, scoped, tag = 'input window, operand 0, single buffered']
    #allocation3 [shape = 's32[1]{0}', space=sflag, size = 0x4, scoped, tag = 'scoped memory for tpu_custom_call.1']
    #allocation4 [shape = 's32[1]{0}', space=sflag, size = 0x4, scoped, tag = 'scoped memory for tpu_custom_call.1']
    #allocation5 [shape = 'u8[32768]{0}', space=vmem, size = 0x8000, scoped, tag = 'input window, operand 1, single buffered']
    #allocation6 [shape = 's32[1]{0}', space=sflag, size = 0x4, scoped, tag = 'scoped memory for tpu_custom_call.1']
    #allocation7 [shape = 'u8[32768]{0}', space=vmem, size = 0x8000, scoped, tag = 'input window, operand 3, single buffered']
    #allocation8 [shape = 'u8[32768]{0}', space=vmem, size = 0x8000, scoped, tag = 'input window, operand 5, single buffered']
    #allocation9 [shape = 's32[1]{0}', space=sflag, size = 0x4, scoped, tag = 'scoped memory for tpu_custom_call.1']
    #allocation10 [shape = 'u8[32768]{0}', space=vmem, size = 0x8000, scoped, tag = 'input window, operand 7, single buffered']
    #allocation11 [shape = 'u8[32768]{0}', space=vmem, size = 0x8000, scoped, tag = 'input window, operand 9, single buffered']
    #allocation12 [shape = 's32[1]{0}', space=sflag, size = 0x4, scoped, tag = 'scoped memory for tpu_custom_call.1']
    #allocation13 [shape = 'u8[32768]{0}', space=vmem, size = 0x8000, scoped, tag = 'input window, operand 11, single buffered']
    #allocation14 [shape = 'u8[16384]{0}', space=vmem, size = 0x4000, scoped, tag = 'output window, operand 0, single buffered']
    %18 = vsyncpa [#allocation3], 0
    %19 = vsyncpa [#allocation6], 0
    %20 = vsyncpa [#allocation9], 0
    %21 = vsyncpa [#allocation12], 0
    %22 = vsyncpa [#allocation4], 0
    // Predicated region
    $region2: #{tpu_custom_call.1} parent=1 // pred_check
      _
    $region3: #{tpu_custom_call.1} parent=1 // pred_check_branch
      %24 = sbr.rel (0) target = $region5
    $region4: #{tpu_custom_call.1} parent=1 // pred_region
      %s26 = ssub.s32 512, 512
      %27 = vsyncadd [#allocation3], %s26
      %s28 = sshll.u32 [#allocation2], 4
      %s29 = int_to_ptr.vmem [resolvable:$true] %s28
      %34 = dma.hbm_to_vmem [thread:$0]  %s0, 512, %s29, [#allocation3], 128, 128, 8
    $region5: #{tpu_custom_call.1} parent=1 // pred_fallthru
      _
    // Predicated region
    $region6: #{tpu_custom_call.1} parent=1 // pred_check
      _
    $region7: #{tpu_custom_call.1} parent=1 // pred_check_branch
      %36 = sbr.rel (0) target = $region9
    $region8: #{tpu_custom_call.1} parent=1 // pred_region
      %s38 = ssub.s32 1024, 1024
      %39 = vsyncadd [#allocation6], %s38
      %s40 = sshll.u32 [#allocation5], 4
      %s41 = int_to_ptr.vmem [resolvable:$true] %s40
      %46 = dma.hbm_to_vmem [thread:$0]  %s1, 1024, %s41, [#allocation6], 64, 64, 4
    $region9: #{tpu_custom_call.1} parent=1 // pred_fallthru
      _
    // Predicated region
    $region10: #{tpu_custom_call.1} parent=1 // pred_check
      _
    $region11: #{tpu_custom_call.1} parent=1 // pred_check_branch
      %48 = sbr.rel (0) target = $region13
    $region12: #{tpu_custom_call.1} parent=1 // pred_region
      _
    $region13: #{tpu_custom_call.1} parent=1 // pred_fallthru
      _
    // Predicated region
    $region14: #{tpu_custom_call.1} parent=1 // pred_check
      _
    $region15: #{tpu_custom_call.1} parent=1 // pred_check_branch
      %50 = sbr.rel (0) target = $region17
    $region16: #{tpu_custom_call.1} parent=1 // pred_region
      %s52 = ssub.s32 1024, 1024
      %53 = vsyncadd [#allocation6], %s52
      %s54 = sshll.u32 [#allocation7], 4
      %s55 = int_to_ptr.vmem [resolvable:$true] %s54
      %60 = dma.hbm_to_vmem [thread:$0]  %s3, 1024, %s55, [#allocation6], 64, 64, 4
    $region17: #{tpu_custom_call.1} parent=1 // pred_fallthru
      _
    // Predicated region
    $region18: #{tpu_custom_call.1} parent=1 // pred_check
      _
    $region19: #{tpu_custom_call.1} parent=1 // pred_check_branch
      %62 = sbr.rel (0) target = $region21
    $region20: #{tpu_custom_call.1} parent=1 // pred_region
      _
    $region21: #{tpu_custom_call.1} parent=1 // pred_fallthru
      _
    // Predicated region
    $region22: #{tpu_custom_call.1} parent=1 // pred_check
      _
    $region23: #{tpu_custom_call.1} parent=1 // pred_check_branch
      %64 = sbr.rel (0) target = $region25
    $region24: #{tpu_custom_call.1} parent=1 // pred_region
      %s66 = ssub.s32 1024, 1024
      %67 = vsyncadd [#allocation9], %s66
      %s68 = sshll.u32 [#allocation8], 4
      %s69 = int_to_ptr.vmem [resolvable:$true] %s68
      %74 = dma.hbm_to_vmem [thread:$0]  %s5, 1024, %s69, [#allocation9], 64, 64, 4
    $region25: #{tpu_custom_call.1} parent=1 // pred_fallthru
      _
    // Predicated region
    $region26: #{tpu_custom_call.1} parent=1 // pred_check
      _
    $region27: #{tpu_custom_call.1} parent=1 // pred_check_branch
      %76 = sbr.rel (0) target = $region29
    $region28: #{tpu_custom_call.1} parent=1 // pred_region
      _
    $region29: #{tpu_custom_call.1} parent=1 // pred_fallthru
      _
    // Predicated region
    $region30: #{tpu_custom_call.1} parent=1 // pred_check
      _
    $region31: #{tpu_custom_call.1} parent=1 // pred_check_branch
      %78 = sbr.rel (0) target = $region33
    $region32: #{tpu_custom_call.1} parent=1 // pred_region
      %s80 = ssub.s32 1024, 1024
      %81 = vsyncadd [#allocation9], %s80
      %s82 = sshll.u32 [#allocation10], 4
      %s83 = int_to_ptr.vmem [resolvable:$true] %s82
      %88 = dma.hbm_to_vmem [thread:$0]  %s7, 1024, %s83, [#allocation9], 64, 64, 4
    $region33: #{tpu_custom_call.1} parent=1 // pred_fallthru
      _
    // Predicated region
    $region34: #{tpu_custom_call.1} parent=1 // pred_check
      _
    $region35: #{tpu_custom_call.1} parent=1 // pred_check_branch
      %90 = sbr.rel (0) target = $region37
    $region36: #{tpu_custom_call.1} parent=1 // pred_region
      _
    $region37: #{tpu_custom_call.1} parent=1 // pred_fallthru
      _
    // Predicated region
    $region38: #{tpu_custom_call.1} parent=1 // pred_check
      _
    $region39: #{tpu_custom_call.1} parent=1 // pred_check_branch
      %92 = sbr.rel (0) target = $region41
    $region40: #{tpu_custom_call.1} parent=1 // pred_region
      %s94 = ssub.s32 1024, 1024
      %95 = vsyncadd [#allocation12], %s94
      %s96 = sshll.u32 [#allocation11], 4
      %s97 = int_to_ptr.vmem [resolvable:$true] %s96
      %102 = dma.hbm_to_vmem [thread:$0]  %s9, 1024, %s97, [#allocation12], 64, 64, 4
    $region41: #{tpu_custom_call.1} parent=1 // pred_fallthru
      _
    // Predicated region
    $region42: #{tpu_custom_call.1} parent=1 // pred_check
      _
    $region43: #{tpu_custom_call.1} parent=1 // pred_check_branch
      %104 = sbr.rel (0) target = $region45
    $region44: #{tpu_custom_call.1} parent=1 // pred_region
      _
    $region45: #{tpu_custom_call.1} parent=1 // pred_fallthru
      _
    // Predicated region
    $region46: #{tpu_custom_call.1} parent=1 // pred_check
      _
    $region47: #{tpu_custom_call.1} parent=1 // pred_check_branch
      %106 = sbr.rel (0) target = $region49
    $region48: #{tpu_custom_call.1} parent=1 // pred_region
      %s108 = ssub.s32 1024, 1024
      %109 = vsyncadd [#allocation12], %s108
      %s110 = sshll.u32 [#allocation13], 4
      %s111 = int_to_ptr.vmem [resolvable:$true] %s110
      %116 = dma.hbm_to_vmem [thread:$0]  %s11, 1024, %s111, [#allocation12], 64, 64, 4
    $region49: #{tpu_custom_call.1} parent=1 // pred_fallthru
      _
    // Predicated region
    $region50: #{tpu_custom_call.1} parent=1 // pred_check
      _
    $region51: #{tpu_custom_call.1} parent=1 // pred_check_branch
      %118 = sbr.rel (0) target = $region53
    $region52: #{tpu_custom_call.1} parent=1 // pred_region
      _
    $region53: #{tpu_custom_call.1} parent=1 // pred_fallthru
      _
    // Predicated region
    $region54: #{tpu_custom_call.1} parent=1 // pred_check
      _
    $region55: #{tpu_custom_call.1} parent=1 // pred_check_branch
      %120 = sbr.rel (0) target = $region57
    $region56: #{tpu_custom_call.1} parent=1 // pred_region
      %121 = dma.done [#allocation3], 512
    $region57: #{tpu_custom_call.1} parent=1 // pred_fallthru
      _
    // Predicated region
    $region58: #{tpu_custom_call.1} parent=1 // pred_check
      _
    $region59: #{tpu_custom_call.1} parent=1 // pred_check_branch
      %123 = sbr.rel (0) target = $region61
    $region60: #{tpu_custom_call.1} parent=1 // pred_region
      %124 = dma.done [#allocation6], 1024
    $region61: #{tpu_custom_call.1} parent=1 // pred_fallthru
      _
    // Predicated region
    $region62: #{tpu_custom_call.1} parent=1 // pred_check
      _
    $region63: #{tpu_custom_call.1} parent=1 // pred_check_branch
      %126 = sbr.rel (0) target = $region65
    $region64: #{tpu_custom_call.1} parent=1 // pred_region
      %127 = dma.done [#allocation6], 1024
    $region65: #{tpu_custom_call.1} parent=1 // pred_fallthru
      _
    // Predicated region
    $region66: #{tpu_custom_call.1} parent=1 // pred_check
      _
    $region67: #{tpu_custom_call.1} parent=1 // pred_check_branch
      %129 = sbr.rel (0) target = $region69
    $region68: #{tpu_custom_call.1} parent=1 // pred_region
      %130 = dma.done [#allocation9], 1024
    $region69: #{tpu_custom_call.1} parent=1 // pred_fallthru
      _
    // Predicated region
    $region70: #{tpu_custom_call.1} parent=1 // pred_check
      _
    $region71: #{tpu_custom_call.1} parent=1 // pred_check_branch
      %132 = sbr.rel (0) target = $region73
    $region72: #{tpu_custom_call.1} parent=1 // pred_region
      %133 = dma.done [#allocation9], 1024
    $region73: #{tpu_custom_call.1} parent=1 // pred_fallthru
      _
    // Predicated region
    $region74: #{tpu_custom_call.1} parent=1 // pred_check
      _
    $region75: #{tpu_custom_call.1} parent=1 // pred_check_branch
      %135 = sbr.rel (0) target = $region77
    $region76: #{tpu_custom_call.1} parent=1 // pred_region
      %136 = dma.done [#allocation12], 1024
    $region77: #{tpu_custom_call.1} parent=1 // pred_fallthru
      _
    // Predicated region
    $region78: #{tpu_custom_call.1} parent=1 // pred_check
      _
    $region79: #{tpu_custom_call.1} parent=1 // pred_check_branch
      %138 = sbr.rel (0) target = $region81
    $region80: #{tpu_custom_call.1} parent=1 // pred_region
      %139 = dma.done [#allocation12], 1024
    $region81: #{tpu_custom_call.1} parent=1 // pred_fallthru
      _
    %v141 = vld [vmem:[#allocation2] sm:$0xff]
    %v142 = vld [vmem:[#allocation2 + $0x8] sm:$0xff]
    %v143 = vld [vmem:[#allocation2 + $0x10] sm:$0xff]
    %v144 = vld [vmem:[#allocation2 + $0x18] sm:$0xff]
    %v145 = vpack.c.bf16 %v142, %v141
    %v146 = vpack.c.bf16 %v144, %v143
    %v147 = vld [vmem:[#allocation5] sm:$0xf]
    %v148 = vld [vmem:[#allocation5 + $0x4] sm:$0xf]
    %v149 = vld [vmem:[#allocation5 + $0x8] sm:$0xf]
    %v150 = vld [vmem:[#allocation5 + $0xc] sm:$0xf]
    %v151 = vld [vmem:[#allocation5 + $0x10] sm:$0xf]
    %v152 = vld [vmem:[#allocation5 + $0x14] sm:$0xf]
    %v153 = vld [vmem:[#allocation5 + $0x18] sm:$0xf]
    %v154 = vld [vmem:[#allocation5 + $0x1c] sm:$0xf]
    %v155 = vld [vmem:[#allocation5 + $0x20] sm:$0xf]
    %v156 = vld [vmem:[#allocation5 + $0x24] sm:$0xf]
    %v157 = vld [vmem:[#allocation5 + $0x28] sm:$0xf]
    %v158 = vld [vmem:[#allocation5 + $0x2c] sm:$0xf]
    %v159 = vld [vmem:[#allocation5 + $0x30] sm:$0xf]
    %v160 = vld [vmem:[#allocation5 + $0x34] sm:$0xf]
    %v161 = vld [vmem:[#allocation5 + $0x38] sm:$0xf]
    %v162 = vld [vmem:[#allocation5 + $0x3c] sm:$0xf]
    %v163 = vld [vmem:[%s2] sm:$0x1]
    %v165 = vlaneseq
    %v166 = vshrl.u32 %v165, 7
    %v167 = vsub.s32 0, %v166
    %v168 = vrot.slane %v163, %v167
    %v186 = vunpack.c.l.b16 %v147
    %v187 = vunpack.c.l.b16 %v148
    %v188 = vunpack.c.l.b16 %v149
    %v189 = vunpack.c.l.b16 %v150
    %v190 = vunpack.c.l.b16 %v151
    %v191 = vunpack.c.l.b16 %v152
    %v192 = vunpack.c.l.b16 %v153
    %v193 = vunpack.c.l.b16 %v154
    %v194 = vunpack.c.l.b16 %v155
    %v195 = vunpack.c.l.b16 %v156
    %v196 = vunpack.c.l.b16 %v157
    %v197 = vunpack.c.l.b16 %v158
    %v198 = vunpack.c.l.b16 %v159
    %v199 = vunpack.c.l.b16 %v160
    %v200 = vunpack.c.l.b16 %v161
    %v201 = vunpack.c.l.b16 %v162
    %v202 = vpack.c.b16 %v187, %v186
    %v203 = vpack.c.b16 %v189, %v188
    %v204 = vpack.c.b16 %v191, %v190
    %v205 = vpack.c.b16 %v193, %v192
    %v206 = vpack.c.b16 %v195, %v194
    %v207 = vpack.c.b16 %v197, %v196
    %v208 = vpack.c.b16 %v199, %v198
    %v209 = vpack.c.b16 %v201, %v200
    %218 = vmatprep.subr.bf16.mxu0 0
    %219 = vmatpush1.bf16.msra.mxu0 %v202
    %220 = vmatprep.subr.bf16.mxu0 0
    %221 = vmatpush1.bf16.msra.mxu0 %v203
    %222 = vmatprep.subr.bf16.mxu0 0
    %223 = vmatpush1.bf16.msra.mxu0 %v204
    %224 = vmatprep.subr.bf16.mxu0 0
    %225 = vmatpush1.bf16.msra.mxu0 %v205
    %226 = vmatprep.subr.bf16.mxu0 0
    %227 = vmatpush1.bf16.msra.mxu0 %v206
    %228 = vmatprep.subr.bf16.mxu0 0
    %229 = vmatpush1.bf16.msra.mxu0 %v207
    %230 = vmatprep.subr.bf16.mxu0 0
    %231 = vmatpush1.bf16.msra.mxu0 %v208
    %232 = vmatprep.subr.bf16.mxu0 0
    %233 = vmatpush1.bf16.msra.mxu0 %v209
    %234 = vmatprep.subr.bf16.mxu0 0
    %235 = vmatpush1.bf16.msra.mxu0 0
    %236 = vmatprep.subr.bf16.mxu0 0
    %237 = vmatpush1.bf16.msra.mxu0 0
    %238 = vmatprep.subr.bf16.mxu0 0
    %239 = vmatpush1.bf16.msra.mxu0 0
    %240 = vmatprep.subr.bf16.mxu0 0
    %241 = vmatpush1.bf16.msra.mxu0 0
    %242 = vmatprep.subr.bf16.mxu0 0
    %243 = vmatpush1.bf16.msra.mxu0 0
    %244 = vmatprep.subr.bf16.mxu0 0
    %245 = vmatpush1.bf16.msra.mxu0 0
    %246 = vmatprep.subr.bf16.mxu0 0
    %247 = vmatpush1.bf16.msra.mxu0 0
    %248 = vmatprep.subr.bf16.mxu0 0
    %249 = vmatpush1.bf16.msra.mxu0 0
    %250 = vmatprep.mubr.bf16.mxu0 0
    %251 = vmatmul.mubr.bf16.gmra.mrb[0].mxu0 %v145
    %v252 = vpop.f32.mrb[0].mxu0
    %v253 = vadd.f32 %v168, %v252
    %v254 = vpop.f32.mrb[0].mxu0
    %v255 = vpop.f32.mrb[0].mxu0
    %v256 = vadd.f32 %v168, %v255
    %v257 = vpop.f32.mrb[0].mxu0
    %258 = vmatprep.mubr.bf16.mxu0 0
    %259 = vmatmul.mubr.bf16.gmra.mrb[0].mxu0 %v146
    %v260 = vpop.f32.mrb[0].mxu0
    %v261 = vadd.f32 %v168, %v260
    %v262 = vpop.f32.mrb[0].mxu0
    %v263 = vpop.f32.mrb[0].mxu0
    %v264 = vadd.f32 %v168, %v263
    %v265 = vpop.f32.mrb[0].mxu0
    %266 = vdwg.mxu0
    %v267 = vmax.f32 %v253, 0.0
    %v268 = vmax.f32 %v256, 0.0
    %v269 = vmax.f32 %v261, 0.0
    %v270 = vmax.f32 %v264, 0.0
    %v271 = vpack.c.bf16 %v268, %v267
    %v272 = vpack.c.bf16 %v270, %v269
    %v273 = vld [vmem:[#allocation7] sm:$0xf]
    %v274 = vld [vmem:[#allocation7 + $0x4] sm:$0xf]
    %v275 = vld [vmem:[#allocation7 + $0x8] sm:$0xf]
    %v276 = vld [vmem:[#allocation7 + $0xc] sm:$0xf]
    %v277 = vld [vmem:[#allocation7 + $0x10] sm:$0xf]
    %v278 = vld [vmem:[#allocation7 + $0x14] sm:$0xf]
    %v279 = vld [vmem:[#allocation7 + $0x18] sm:$0xf]
    %v280 = vld [vmem:[#allocation7 + $0x1c] sm:$0xf]
    %v281 = vld [vmem:[#allocation7 + $0x20] sm:$0xf]
    %v282 = vld [vmem:[#allocation7 + $0x24] sm:$0xf]
    %v283 = vld [vmem:[#allocation7 + $0x28] sm:$0xf]
    %v284 = vld [vmem:[#allocation7 + $0x2c] sm:$0xf]
    %v285 = vld [vmem:[#allocation7 + $0x30] sm:$0xf]
    %v286 = vld [vmem:[#allocation7 + $0x34] sm:$0xf]
    %v287 = vld [vmem:[#allocation7 + $0x38] sm:$0xf]
    %v288 = vld [vmem:[#allocation7 + $0x3c] sm:$0xf]
    %v289 = vld [vmem:[%s4] sm:$0x1]
    %v291 = vlaneseq
    %v292 = vshrl.u32 %v291, 7
    %v293 = vsub.s32 0, %v292
    %v294 = vrot.slane %v289, %v293
    %v312 = vunpack.c.l.b16 %v273
    %v313 = vunpack.c.l.b16 %v274
    %v314 = vunpack.c.l.b16 %v275
    %v315 = vunpack.c.l.b16 %v276
    %v316 = vunpack.c.l.b16 %v277
    %v317 = vunpack.c.l.b16 %v278
    %v318 = vunpack.c.l.b16 %v279
    %v319 = vunpack.c.l.b16 %v280
    %v320 = vunpack.c.l.b16 %v281
    %v321 = vunpack.c.l.b16 %v282
    %v322 = vunpack.c.l.b16 %v283
    %v323 = vunpack.c.l.b16 %v284
    %v324 = vunpack.c.l.b16 %v285
    %v325 = vunpack.c.l.b16 %v286
    %v326 = vunpack.c.l.b16 %v287
    %v327 = vunpack.c.l.b16 %v288
    %v328 = vpack.c.b16 %v313, %v312
    %v329 = vpack.c.b16 %v315, %v314
    %v330 = vpack.c.b16 %v317, %v316
    %v331 = vpack.c.b16 %v319, %v318
    %v332 = vpack.c.b16 %v321, %v320
    %v333 = vpack.c.b16 %v323, %v322
    %v334 = vpack.c.b16 %v325, %v324
    %v335 = vpack.c.b16 %v327, %v326
    %344 = vmatprep.subr.bf16.mxu0 0
    %345 = vmatpush1.bf16.msra.mxu0 %v328
    %346 = vmatprep.subr.bf16.mxu0 0
    %347 = vmatpush1.bf16.msra.mxu0 %v329
    %348 = vmatprep.subr.bf16.mxu0 0
    %349 = vmatpush1.bf16.msra.mxu0 %v330
    %350 = vmatprep.subr.bf16.mxu0 0
    %351 = vmatpush1.bf16.msra.mxu0 %v331
    %352 = vmatprep.subr.bf16.mxu0 0
    %353 = vmatpush1.bf16.msra.mxu0 %v332
    %354 = vmatprep.subr.bf16.mxu0 0
    %355 = vmatpush1.bf16.msra.mxu0 %v333
    %356 = vmatprep.subr.bf16.mxu0 0
    %357 = vmatpush1.bf16.msra.mxu0 %v334
    %358 = vmatprep.subr.bf16.mxu0 0
    %359 = vmatpush1.bf16.msra.mxu0 %v335
    %360 = vmatprep.subr.bf16.mxu0 0
    %361 = vmatpush1.bf16.msra.mxu0 0
    %362 = vmatprep.subr.bf16.mxu0 0
    %363 = vmatpush1.bf16.msra.mxu0 0
    %364 = vmatprep.subr.bf16.mxu0 0
    %365 = vmatpush1.bf16.msra.mxu0 0
    %366 = vmatprep.subr.bf16.mxu0 0
    %367 = vmatpush1.bf16.msra.mxu0 0
    %368 = vmatprep.subr.bf16.mxu0 0
    %369 = vmatpush1.bf16.msra.mxu0 0
    %370 = vmatprep.subr.bf16.mxu0 0
    %371 = vmatpush1.bf16.msra.mxu0 0
    %372 = vmatprep.subr.bf16.mxu0 0
    %373 = vmatpush1.bf16.msra.mxu0 0
    %374 = vmatprep.subr.bf16.mxu0 0
    %375 = vmatpush1.bf16.msra.mxu0 0
    %376 = vmatprep.mubr.bf16.mxu0 0
    %377 = vmatmul.mubr.bf16.gmra.mrb[0].mxu0 %v271
    %v378 = vpop.f32.mrb[0].mxu0
    %v379 = vadd.f32 %v294, %v378
    %v380 = vpop.f32.mrb[0].mxu0
    %v381 = vpop.f32.mrb[0].mxu0
    %v382 = vadd.f32 %v294, %v381
    %v383 = vpop.f32.mrb[0].mxu0
    %384 = vmatprep.mubr.bf16.mxu0 0
    %385 = vmatmul.mubr.bf16.gmra.mrb[0].mxu0 %v272
    %v386 = vpop.f32.mrb[0].mxu0
    %v387 = vadd.f32 %v294, %v386
    %v388 = vpop.f32.mrb[0].mxu0
    %v389 = vpop.f32.mrb[0].mxu0
    %v390 = vadd.f32 %v294, %v389
    %v391 = vpop.f32.mrb[0].mxu0
    %392 = vdwg.mxu0
    %v393 = vmax.f32 %v379, 0.0
    %v394 = vmax.f32 %v382, 0.0
    %v395 = vmax.f32 %v387, 0.0
    %v396 = vmax.f32 %v390, 0.0
    %v397 = vpack.c.bf16 %v394, %v393
    %v398 = vpack.c.bf16 %v396, %v395
    %v399 = vld [vmem:[#allocation8] sm:$0xf]
    %v400 = vld [vmem:[#allocation8 + $0x4] sm:$0xf]
    %v401 = vld [vmem:[#allocation8 + $0x8] sm:$0xf]
    %v402 = vld [vmem:[#allocation8 + $0xc] sm:$0xf]
    %v403 = vld [vmem:[#allocation8 + $0x10] sm:$0xf]
    %v404 = vld [vmem:[#allocation8 + $0x14] sm:$0xf]
    %v405 = vld [vmem:[#allocation8 + $0x18] sm:$0xf]
    %v406 = vld [vmem:[#allocation8 + $0x1c] sm:$0xf]
    %v407 = vld [vmem:[#allocation8 + $0x20] sm:$0xf]
    %v408 = vld [vmem:[#allocation8 + $0x24] sm:$0xf]
    %v409 = vld [vmem:[#allocation8 + $0x28] sm:$0xf]
    %v410 = vld [vmem:[#allocation8 + $0x2c] sm:$0xf]
    %v411 = vld [vmem:[#allocation8 + $0x30] sm:$0xf]
    %v412 = vld [vmem:[#allocation8 + $0x34] sm:$0xf]
    %v413 = vld [vmem:[#allocation8 + $0x38] sm:$0xf]
    %v414 = vld [vmem:[#allocation8 + $0x3c] sm:$0xf]
    %v415 = vld [vmem:[%s6] sm:$0x1]
    %v417 = vlaneseq
    %v418 = vshrl.u32 %v417, 7
    %v419 = vsub.s32 0, %v418
    %v420 = vrot.slane %v415, %v419
    %v438 = vunpack.c.l.b16 %v399
    %v439 = vunpack.c.l.b16 %v400
    %v440 = vunpack.c.l.b16 %v401
    %v441 = vunpack.c.l.b16 %v402
    %v442 = vunpack.c.l.b16 %v403
    %v443 = vunpack.c.l.b16 %v404
    %v444 = vunpack.c.l.b16 %v405
    %v445 = vunpack.c.l.b16 %v406
    %v446 = vunpack.c.l.b16 %v407
    %v447 = vunpack.c.l.b16 %v408
    %v448 = vunpack.c.l.b16 %v409
    %v449 = vunpack.c.l.b16 %v410
    %v450 = vunpack.c.l.b16 %v411
    %v451 = vunpack.c.l.b16 %v412
    %v452 = vunpack.c.l.b16 %v413
    %v453 = vunpack.c.l.b16 %v414
    %v454 = vpack.c.b16 %v439, %v438
    %v455 = vpack.c.b16 %v441, %v440
    %v456 = vpack.c.b16 %v443, %v442
    %v457 = vpack.c.b16 %v445, %v444
    %v458 = vpack.c.b16 %v447, %v446
    %v459 = vpack.c.b16 %v449, %v448
    %v460 = vpack.c.b16 %v451, %v450
    %v461 = vpack.c.b16 %v453, %v452
    %470 = vmatprep.subr.bf16.mxu0 0
    %471 = vmatpush1.bf16.msra.mxu0 %v454
    %472 = vmatprep.subr.bf16.mxu0 0
    %473 = vmatpush1.bf16.msra.mxu0 %v455
    %474 = vmatprep.subr.bf16.mxu0 0
    %475 = vmatpush1.bf16.msra.mxu0 %v456
    %476 = vmatprep.subr.bf16.mxu0 0
    %477 = vmatpush1.bf16.msra.mxu0 %v457
    %478 = vmatprep.subr.bf16.mxu0 0
    %479 = vmatpush1.bf16.msra.mxu0 %v458
    %480 = vmatprep.subr.bf16.mxu0 0
    %481 = vmatpush1.bf16.msra.mxu0 %v459
    %482 = vmatprep.subr.bf16.mxu0 0
    %483 = vmatpush1.bf16.msra.mxu0 %v460
    %484 = vmatprep.subr.bf16.mxu0 0
    %485 = vmatpush1.bf16.msra.mxu0 %v461
    %486 = vmatprep.subr.bf16.mxu0 0
    %487 = vmatpush1.bf16.msra.mxu0 0
    %488 = vmatprep.subr.bf16.mxu0 0
    %489 = vmatpush1.bf16.msra.mxu0 0
    %490 = vmatprep.subr.bf16.mxu0 0
    %491 = vmatpush1.bf16.msra.mxu0 0
    %492 = vmatprep.subr.bf16.mxu0 0
    %493 = vmatpush1.bf16.msra.mxu0 0
    %494 = vmatprep.subr.bf16.mxu0 0
    %495 = vmatpush1.bf16.msra.mxu0 0
    %496 = vmatprep.subr.bf16.mxu0 0
    %497 = vmatpush1.bf16.msra.mxu0 0
    %498 = vmatprep.subr.bf16.mxu0 0
    %499 = vmatpush1.bf16.msra.mxu0 0
    %500 = vmatprep.subr.bf16.mxu0 0
    %501 = vmatpush1.bf16.msra.mxu0 0
    %502 = vmatprep.mubr.bf16.mxu0 0
    %503 = vmatmul.mubr.bf16.gmra.mrb[0].mxu0 %v397
    %v504 = vpop.f32.mrb[0].mxu0
    %v505 = vadd.f32 %v420, %v504
    %v506 = vpop.f32.mrb[0].mxu0
    %v507 = vpop.f32.mrb[0].mxu0
    %v508 = vadd.f32 %v420, %v507
    %v509 = vpop.f32.mrb[0].mxu0
    %510 = vmatprep.mubr.bf16.mxu0 0
    %511 = vmatmul.mubr.bf16.gmra.mrb[0].mxu0 %v398
    %v512 = vpop.f32.mrb[0].mxu0
    %v513 = vadd.f32 %v420, %v512
    %v514 = vpop.f32.mrb[0].mxu0
    %v515 = vpop.f32.mrb[0].mxu0
    %v516 = vadd.f32 %v420, %v515
    %v517 = vpop.f32.mrb[0].mxu0
    %518 = vdwg.mxu0
    %v519 = vpack.c.bf16 %v508, %v505
    %v520 = vpack.c.bf16 %v516, %v513
    %v521 = vld [vmem:[#allocation10] sm:$0xf]
    %v522 = vld [vmem:[#allocation10 + $0x4] sm:$0xf]
    %v523 = vld [vmem:[#allocation10 + $0x8] sm:$0xf]
    %v524 = vld [vmem:[#allocation10 + $0xc] sm:$0xf]
    %v525 = vld [vmem:[#allocation10 + $0x10] sm:$0xf]
    %v526 = vld [vmem:[#allocation10 + $0x14] sm:$0xf]
    %v527 = vld [vmem:[#allocation10 + $0x18] sm:$0xf]
    %v528 = vld [vmem:[#allocation10 + $0x1c] sm:$0xf]
    %v529 = vld [vmem:[#allocation10 + $0x20] sm:$0xf]
    %v530 = vld [vmem:[#allocation10 + $0x24] sm:$0xf]
    %v531 = vld [vmem:[#allocation10 + $0x28] sm:$0xf]
    %v532 = vld [vmem:[#allocation10 + $0x2c] sm:$0xf]
    %v533 = vld [vmem:[#allocation10 + $0x30] sm:$0xf]
    %v534 = vld [vmem:[#allocation10 + $0x34] sm:$0xf]
    %v535 = vld [vmem:[#allocation10 + $0x38] sm:$0xf]
    %v536 = vld [vmem:[#allocation10 + $0x3c] sm:$0xf]
    %v537 = vld [vmem:[%s8] sm:$0x1]
    %v539 = vlaneseq
    %v540 = vshrl.u32 %v539, 7
    %v541 = vsub.s32 0, %v540
    %v542 = vrot.slane %v537, %v541
    %v560 = vunpack.c.l.b16 %v521
    %v561 = vunpack.c.l.b16 %v522
    %v562 = vunpack.c.l.b16 %v523
    %v563 = vunpack.c.l.b16 %v524
    %v564 = vunpack.c.l.b16 %v525
    %v565 = vunpack.c.l.b16 %v526
    %v566 = vunpack.c.l.b16 %v527
    %v567 = vunpack.c.l.b16 %v528
    %v568 = vunpack.c.l.b16 %v529
    %v569 = vunpack.c.l.b16 %v530
    %v570 = vunpack.c.l.b16 %v531
    %v571 = vunpack.c.l.b16 %v532
    %v572 = vunpack.c.l.b16 %v533
    %v573 = vunpack.c.l.b16 %v534
    %v574 = vunpack.c.l.b16 %v535
    %v575 = vunpack.c.l.b16 %v536
    %v576 = vpack.c.b16 %v561, %v560
    %v577 = vpack.c.b16 %v563, %v562
    %v578 = vpack.c.b16 %v565, %v564
    %v579 = vpack.c.b16 %v567, %v566
    %v580 = vpack.c.b16 %v569, %v568
    %v581 = vpack.c.b16 %v571, %v570
    %v582 = vpack.c.b16 %v573, %v572
    %v583 = vpack.c.b16 %v575, %v574
    %592 = vmatprep.subr.bf16.mxu0 0
    %593 = vmatpush1.bf16.msra.mxu0 %v576
    %594 = vmatprep.subr.bf16.mxu0 0
    %595 = vmatpush1.bf16.msra.mxu0 %v577
    %596 = vmatprep.subr.bf16.mxu0 0
    %597 = vmatpush1.bf16.msra.mxu0 %v578
    %598 = vmatprep.subr.bf16.mxu0 0
    %599 = vmatpush1.bf16.msra.mxu0 %v579
    %600 = vmatprep.subr.bf16.mxu0 0
    %601 = vmatpush1.bf16.msra.mxu0 %v580
    %602 = vmatprep.subr.bf16.mxu0 0
    %603 = vmatpush1.bf16.msra.mxu0 %v581
    %604 = vmatprep.subr.bf16.mxu0 0
    %605 = vmatpush1.bf16.msra.mxu0 %v582
    %606 = vmatprep.subr.bf16.mxu0 0
    %607 = vmatpush1.bf16.msra.mxu0 %v583
    %608 = vmatprep.subr.bf16.mxu0 0
    %609 = vmatpush1.bf16.msra.mxu0 0
    %610 = vmatprep.subr.bf16.mxu0 0
    %611 = vmatpush1.bf16.msra.mxu0 0
    %612 = vmatprep.subr.bf16.mxu0 0
    %613 = vmatpush1.bf16.msra.mxu0 0
    %614 = vmatprep.subr.bf16.mxu0 0
    %615 = vmatpush1.bf16.msra.mxu0 0
    %616 = vmatprep.subr.bf16.mxu0 0
    %617 = vmatpush1.bf16.msra.mxu0 0
    %618 = vmatprep.subr.bf16.mxu0 0
    %619 = vmatpush1.bf16.msra.mxu0 0
    %620 = vmatprep.subr.bf16.mxu0 0
    %621 = vmatpush1.bf16.msra.mxu0 0
    %622 = vmatprep.subr.bf16.mxu0 0
    %623 = vmatpush1.bf16.msra.mxu0 0
    %624 = vmatprep.mubr.bf16.mxu0 0
    %625 = vmatmul.mubr.bf16.gmra.mrb[0].mxu0 %v519
    %v626 = vpop.f32.mrb[0].mxu0
    %v627 = vadd.f32 %v542, %v626
    %v628 = vpop.f32.mrb[0].mxu0
    %v629 = vpop.f32.mrb[0].mxu0
    %v630 = vadd.f32 %v542, %v629
    %v631 = vpop.f32.mrb[0].mxu0
    %632 = vmatprep.mubr.bf16.mxu0 0
    %633 = vmatmul.mubr.bf16.gmra.mrb[0].mxu0 %v520
    %v634 = vpop.f32.mrb[0].mxu0
    %v635 = vadd.f32 %v542, %v634
    %v636 = vpop.f32.mrb[0].mxu0
    %v637 = vpop.f32.mrb[0].mxu0
    %v638 = vadd.f32 %v542, %v637
    %v639 = vpop.f32.mrb[0].mxu0
    %640 = vdwg.mxu0
    %v641 = vmax.f32 %v627, 0.0
    %v642 = vmax.f32 %v630, 0.0
    %v643 = vmax.f32 %v635, 0.0
    %v644 = vmax.f32 %v638, 0.0
    %v645 = vpack.c.bf16 %v642, %v641
    %v646 = vpack.c.bf16 %v644, %v643
    %v647 = vld [vmem:[#allocation11] sm:$0xf]
    %v648 = vld [vmem:[#allocation11 + $0x4] sm:$0xf]
    %v649 = vld [vmem:[#allocation11 + $0x8] sm:$0xf]
    %v650 = vld [vmem:[#allocation11 + $0xc] sm:$0xf]
    %v651 = vld [vmem:[#allocation11 + $0x10] sm:$0xf]
    %v652 = vld [vmem:[#allocation11 + $0x14] sm:$0xf]
    %v653 = vld [vmem:[#allocation11 + $0x18] sm:$0xf]
    %v654 = vld [vmem:[#allocation11 + $0x1c] sm:$0xf]
    %v655 = vld [vmem:[#allocation11 + $0x20] sm:$0xf]
    %v656 = vld [vmem:[#allocation11 + $0x24] sm:$0xf]
    %v657 = vld [vmem:[#allocation11 + $0x28] sm:$0xf]
    %v658 = vld [vmem:[#allocation11 + $0x2c] sm:$0xf]
    %v659 = vld [vmem:[#allocation11 + $0x30] sm:$0xf]
    %v660 = vld [vmem:[#allocation11 + $0x34] sm:$0xf]
    %v661 = vld [vmem:[#allocation11 + $0x38] sm:$0xf]
    %v662 = vld [vmem:[#allocation11 + $0x3c] sm:$0xf]
    %v663 = vld [vmem:[%s10] sm:$0x1]
    %v665 = vlaneseq
    %v666 = vshrl.u32 %v665, 7
    %v667 = vsub.s32 0, %v666
    %v668 = vrot.slane %v663, %v667
    %v686 = vunpack.c.l.b16 %v647
    %v687 = vunpack.c.l.b16 %v648
    %v688 = vunpack.c.l.b16 %v649
    %v689 = vunpack.c.l.b16 %v650
    %v690 = vunpack.c.l.b16 %v651
    %v691 = vunpack.c.l.b16 %v652
    %v692 = vunpack.c.l.b16 %v653
    %v693 = vunpack.c.l.b16 %v654
    %v694 = vunpack.c.l.b16 %v655
    %v695 = vunpack.c.l.b16 %v656
    %v696 = vunpack.c.l.b16 %v657
    %v697 = vunpack.c.l.b16 %v658
    %v698 = vunpack.c.l.b16 %v659
    %v699 = vunpack.c.l.b16 %v660
    %v700 = vunpack.c.l.b16 %v661
    %v701 = vunpack.c.l.b16 %v662
    %v702 = vpack.c.b16 %v687, %v686
    %v703 = vpack.c.b16 %v689, %v688
    %v704 = vpack.c.b16 %v691, %v690
    %v705 = vpack.c.b16 %v693, %v692
    %v706 = vpack.c.b16 %v695, %v694
    %v707 = vpack.c.b16 %v697, %v696
    %v708 = vpack.c.b16 %v699, %v698
    %v709 = vpack.c.b16 %v701, %v700
    %718 = vmatprep.subr.bf16.mxu0 0
    %719 = vmatpush1.bf16.msra.mxu0 %v702
    %720 = vmatprep.subr.bf16.mxu0 0
    %721 = vmatpush1.bf16.msra.mxu0 %v703
    %722 = vmatprep.subr.bf16.mxu0 0
    %723 = vmatpush1.bf16.msra.mxu0 %v704
    %724 = vmatprep.subr.bf16.mxu0 0
    %725 = vmatpush1.bf16.msra.mxu0 %v705
    %726 = vmatprep.subr.bf16.mxu0 0
    %727 = vmatpush1.bf16.msra.mxu0 %v706
    %728 = vmatprep.subr.bf16.mxu0 0
    %729 = vmatpush1.bf16.msra.mxu0 %v707
    %730 = vmatprep.subr.bf16.mxu0 0
    %731 = vmatpush1.bf16.msra.mxu0 %v708
    %732 = vmatprep.subr.bf16.mxu0 0
    %733 = vmatpush1.bf16.msra.mxu0 %v709
    %734 = vmatprep.subr.bf16.mxu0 0
    %735 = vmatpush1.bf16.msra.mxu0 0
    %736 = vmatprep.subr.bf16.mxu0 0
    %737 = vmatpush1.bf16.msra.mxu0 0
    %738 = vmatprep.subr.bf16.mxu0 0
    %739 = vmatpush1.bf16.msra.mxu0 0
    %740 = vmatprep.subr.bf16.mxu0 0
    %741 = vmatpush1.bf16.msra.mxu0 0
    %742 = vmatprep.subr.bf16.mxu0 0
    %743 = vmatpush1.bf16.msra.mxu0 0
    %744 = vmatprep.subr.bf16.mxu0 0
    %745 = vmatpush1.bf16.msra.mxu0 0
    %746 = vmatprep.subr.bf16.mxu0 0
    %747 = vmatpush1.bf16.msra.mxu0 0
    %748 = vmatprep.subr.bf16.mxu0 0
    %749 = vmatpush1.bf16.msra.mxu0 0
    %750 = vmatprep.mubr.bf16.mxu0 0
    %751 = vmatmul.mubr.bf16.gmra.mrb[0].mxu0 %v645
    %v752 = vpop.f32.mrb[0].mxu0
    %v753 = vadd.f32 %v668, %v752
    %v754 = vpop.f32.mrb[0].mxu0
    %v755 = vpop.f32.mrb[0].mxu0
    %v756 = vadd.f32 %v668, %v755
    %v757 = vpop.f32.mrb[0].mxu0
    %758 = vmatprep.mubr.bf16.mxu0 0
    %759 = vmatmul.mubr.bf16.gmra.mrb[0].mxu0 %v646
    %v760 = vpop.f32.mrb[0].mxu0
    %v761 = vadd.f32 %v668, %v760
    %v762 = vpop.f32.mrb[0].mxu0
    %v763 = vpop.f32.mrb[0].mxu0
    %v764 = vadd.f32 %v668, %v763
    %v765 = vpop.f32.mrb[0].mxu0
    %766 = vdwg.mxu0
    %v767 = vmax.f32 %v753, 0.0
    %v768 = vmax.f32 %v756, 0.0
    %v769 = vmax.f32 %v761, 0.0
    %v770 = vmax.f32 %v764, 0.0
    %v771 = vpack.c.bf16 %v768, %v767
    %v772 = vpack.c.bf16 %v770, %v769
    %v773 = vld [vmem:[#allocation13] sm:$0xf]
    %v774 = vld [vmem:[#allocation13 + $0x4] sm:$0xf]
    %v775 = vld [vmem:[#allocation13 + $0x8] sm:$0xf]
    %v776 = vld [vmem:[#allocation13 + $0xc] sm:$0xf]
    %v777 = vld [vmem:[#allocation13 + $0x10] sm:$0xf]
    %v778 = vld [vmem:[#allocation13 + $0x14] sm:$0xf]
    %v779 = vld [vmem:[#allocation13 + $0x18] sm:$0xf]
    %v780 = vld [vmem:[#allocation13 + $0x1c] sm:$0xf]
    %v781 = vld [vmem:[#allocation13 + $0x20] sm:$0xf]
    %v782 = vld [vmem:[#allocation13 + $0x24] sm:$0xf]
    %v783 = vld [vmem:[#allocation13 + $0x28] sm:$0xf]
    %v784 = vld [vmem:[#allocation13 + $0x2c] sm:$0xf]
    %v785 = vld [vmem:[#allocation13 + $0x30] sm:$0xf]
    %v786 = vld [vmem:[#allocation13 + $0x34] sm:$0xf]
    %v787 = vld [vmem:[#allocation13 + $0x38] sm:$0xf]
    %v788 = vld [vmem:[#allocation13 + $0x3c] sm:$0xf]
    %v789 = vld [vmem:[%s12] sm:$0x1]
    %v791 = vlaneseq
    %v792 = vshrl.u32 %v791, 7
    %v793 = vsub.s32 0, %v792
    %v794 = vrot.slane %v789, %v793
    %v812 = vunpack.c.l.b16 %v773
    %v813 = vunpack.c.l.b16 %v774
    %v814 = vunpack.c.l.b16 %v775
    %v815 = vunpack.c.l.b16 %v776
    %v816 = vunpack.c.l.b16 %v777
    %v817 = vunpack.c.l.b16 %v778
    %v818 = vunpack.c.l.b16 %v779
    %v819 = vunpack.c.l.b16 %v780
    %v820 = vunpack.c.l.b16 %v781
    %v821 = vunpack.c.l.b16 %v782
    %v822 = vunpack.c.l.b16 %v783
    %v823 = vunpack.c.l.b16 %v784
    %v824 = vunpack.c.l.b16 %v785
    %v825 = vunpack.c.l.b16 %v786
    %v826 = vunpack.c.l.b16 %v787
    %v827 = vunpack.c.l.b16 %v788
    %v828 = vpack.c.b16 %v813, %v812
    %v829 = vpack.c.b16 %v815, %v814
    %v830 = vpack.c.b16 %v817, %v816
    %v831 = vpack.c.b16 %v819, %v818
    %v832 = vpack.c.b16 %v821, %v820
    %v833 = vpack.c.b16 %v823, %v822
    %v834 = vpack.c.b16 %v825, %v824
    %v835 = vpack.c.b16 %v827, %v826
    %844 = vmatprep.subr.bf16.mxu0 0
    %845 = vmatpush1.bf16.msra.mxu0 %v828
    %846 = vmatprep.subr.bf16.mxu0 0
    %847 = vmatpush1.bf16.msra.mxu0 %v829
    %848 = vmatprep.subr.bf16.mxu0 0
    %849 = vmatpush1.bf16.msra.mxu0 %v830
    %850 = vmatprep.subr.bf16.mxu0 0
    %851 = vmatpush1.bf16.msra.mxu0 %v831
    %852 = vmatprep.subr.bf16.mxu0 0
    %853 = vmatpush1.bf16.msra.mxu0 %v832
    %854 = vmatprep.subr.bf16.mxu0 0
    %855 = vmatpush1.bf16.msra.mxu0 %v833
    %856 = vmatprep.subr.bf16.mxu0 0
    %857 = vmatpush1.bf16.msra.mxu0 %v834
    %858 = vmatprep.subr.bf16.mxu0 0
    %859 = vmatpush1.bf16.msra.mxu0 %v835
    %860 = vmatprep.subr.bf16.mxu0 0
    %861 = vmatpush1.bf16.msra.mxu0 0
    %862 = vmatprep.subr.bf16.mxu0 0
    %863 = vmatpush1.bf16.msra.mxu0 0
    %864 = vmatprep.subr.bf16.mxu0 0
    %865 = vmatpush1.bf16.msra.mxu0 0
    %866 = vmatprep.subr.bf16.mxu0 0
    %867 = vmatpush1.bf16.msra.mxu0 0
    %868 = vmatprep.subr.bf16.mxu0 0
    %869 = vmatpush1.bf16.msra.mxu0 0
    %870 = vmatprep.subr.bf16.mxu0 0
    %871 = vmatpush1.bf16.msra.mxu0 0
    %872 = vmatprep.subr.bf16.mxu0 0
    %873 = vmatpush1.bf16.msra.mxu0 0
    %874 = vmatprep.subr.bf16.mxu0 0
    %875 = vmatpush1.bf16.msra.mxu0 0
    %876 = vmatprep.mubr.bf16.mxu0 0
    %877 = vmatmul.mubr.bf16.gmra.mrb[0].mxu0 %v771
    %v878 = vpop.f32.mrb[0].mxu0
    %v879 = vadd.f32 %v794, %v878
    %v880 = vpop.f32.mrb[0].mxu0
    %v881 = vpop.f32.mrb[0].mxu0
    %v882 = vadd.f32 %v794, %v881
    %v883 = vpop.f32.mrb[0].mxu0
    %884 = vmatprep.mubr.bf16.mxu0 0
    %885 = vmatmul.mubr.bf16.gmra.mrb[0].mxu0 %v772
    %v886 = vpop.f32.mrb[0].mxu0
    %v887 = vadd.f32 %v794, %v886
    %v888 = vpop.f32.mrb[0].mxu0
    %v889 = vpop.f32.mrb[0].mxu0
    %v890 = vadd.f32 %v794, %v889
    %v891 = vpop.f32.mrb[0].mxu0
    %892 = vdwg.mxu0
    %893 = vst [vmem:[#allocation14] sm:$0xff] %v879
    %894 = vst [vmem:[#allocation14 + $0x8] sm:$0xff] %v882
    %895 = vst [vmem:[#allocation14 + $0x10] sm:$0xff] %v887
    %896 = vst [vmem:[#allocation14 + $0x18] sm:$0xff] %v890
    // Predicated region
    $region82: #{tpu_custom_call.1} parent=1 // pred_check
      _
    $region83: #{tpu_custom_call.1} parent=1 // pred_check_branch
      %898 = sbr.rel (0) target = $region85
    $region84: #{tpu_custom_call.1} parent=1 // pred_region
      %s900 = ssub.s32 512, 512
      %901 = vsyncadd [#allocation4], %s900
      %s902 = sshll.u32 [#allocation14], 4
      %s903 = int_to_ptr.vmem [resolvable:$true] %s902
      %908 = dma.vmem_to_hbm [thread:$0]  %s903, 512, %s13, [#allocation4], 128, 128, 8
    $region85: #{tpu_custom_call.1} parent=1 // pred_fallthru
      _
    // Predicated region
    $region86: #{tpu_custom_call.1} parent=1 // pred_check
      _
    $region87: #{tpu_custom_call.1} parent=1 // pred_check_branch
      %910 = sbr.rel (0) target = $region89
    $region88: #{tpu_custom_call.1} parent=1 // pred_region
      %911 = dma.done [#allocation4], 512
    $region89: #{tpu_custom_call.1} parent=1 // pred_fallthru
      _
    %912 = vsyncpa [#allocation3], 1
    %913 = vsyncpa [#allocation6], 1
    %914 = vsyncpa [#allocation9], 1
    %915 = vsyncpa [#allocation12], 1
    %916 = vsyncpa [#allocation4], 1

</llo_original>
